<compile_context>
chip_gen: v7x
topology: tpu7x:2x2x1
jax: 0.10.0
libtpu: 0.0.40
codegen_flags: <defaults>
</compile_context>

<pallas_src>
import functools
import math

import jax
import jax.numpy as jnp
from jax.experimental import pallas as pl
from jax.experimental.pallas import tpu as pltpu


def _round_up(x, m):
    return ((x + m - 1) // m) * m


def _pick_tile(total, target, quantum):
    """Largest multiple of `quantum` that divides `total` and is <= target."""
    best = quantum
    t = quantum
    while t <= min(target, total):
        if total % t == 0:
            best = t
        t += quantum
    return best


def _gelu_exact(x):
    # PyTorch nn.GELU() default == exact erf-based GELU.
    # TODO(synk): on v5e consider tanh-approx GELU (EUP slot) if numerics allow.
    return 0.5 * x * (1.0 + jax.lax.erf(x * (1.0 / math.sqrt(2.0))))


def _ffn_kernel(x_ref, gamma_ref, beta_ref, w1_ref, b1_ref, w2_ref, b2_ref,
                o_ref, xn_scr, acc_scr, *, e_real, e_col_pad):
    k = pl.program_id(1)

    # ---- k == 0: LayerNorm once per row tile, cache xn (bf16), zero acc ----
    @pl.when(k == 0)
    def _init():
        x = x_ref[...].astype(jnp.float32)                      # (TM, E_pad)
        eps = 1e-5
        inv_e = 1.0 / e_real
        mean = jnp.sum(x, axis=-1, keepdims=True) * inv_e       # pads are 0
        cen = x - mean
        # padded columns each contribute (-mean)^2; subtract them back out
        sq = jnp.sum(cen * cen, axis=-1, keepdims=True)
        var = (sq - e_col_pad * mean * mean) * inv_e
        xn = cen * jax.lax.rsqrt(var + eps)
        xn = xn * gamma_ref[...] + beta_ref[...]                 # pads -> 0
        xn_scr[...] = xn.astype(jnp.bfloat16)
        acc_scr[...] = jnp.zeros_like(acc_scr)

    # ---- hidden-slice k: GELU(xn @ w1_k + b1_k) @ w2_k, accumulate in f32 ----
    h = jnp.dot(xn_scr[...], w1_ref[...],
                preferred_element_type=jnp.float32)              # (TM, TH)
    h = _gelu_exact(h + b1_ref[...])
    acc_scr[...] += jnp.dot(h.astype(jnp.bfloat16), w2_ref[...],
                            preferred_element_type=jnp.float32)  # (TM, E_pad)

    # ---- last k: second bias + GELU + residual, write out ----
    @pl.when(k == pl.num_programs(1) - 1)
    def _finish():
        o = _gelu_exact(acc_scr[...] + b2_ref[...])
        # Dropout(p=0.0) is the identity.
        o_ref[...] = (o + x_ref[...].astype(jnp.float32)).astype(o_ref.dtype)


def feed_forward_block(x, gamma, beta, w1, b1, w2, b2,
                       *, tm_target=256, th_target=512):
    """x: (B, S, E) float32; w1: (E, H); w2: (H, E). Returns (B, S, E)."""
    B, S, E = x.shape
    H = w1.shape[1]
    M = B * S

    # lane-dense padding (last dim of every block a multiple of 128)
    E_pad = _round_up(E, 128)
    H_pad = _round_up(H, 128)

    # row tile: large enough to pipeline, sublane-aligned
    if M <= tm_target:
        TM = _round_up(M, 16)
        M_pad = TM
    else:
        TM = tm_target
        M_pad = _round_up(M, TM)

    # hidden tile: bounds (E_pad,TH)+(TH,E_pad) weight slices and (TM,TH) h
    TH = _pick_tile(H_pad, th_target, 128)

    x2d = jnp.pad(x.reshape(M, E), ((0, M_pad - M), (0, E_pad - E)))
    gamma_p = jnp.pad(gamma.reshape(1, E).astype(jnp.float32),
                      ((0, 0), (0, E_pad - E)))
    beta_p = jnp.pad(beta.reshape(1, E).astype(jnp.float32),
                     ((0, 0), (0, E_pad - E)))
    w1_p = jnp.pad(w1, ((0, E_pad - E), (0, H_pad - H))).astype(jnp.bfloat16)
    b1_p = jnp.pad(b1.reshape(1, H).astype(jnp.float32),
                   ((0, 0), (0, H_pad - H)))
    w2_p = jnp.pad(w2, ((0, H_pad - H), (0, E_pad - E))).astype(jnp.bfloat16)
    b2_p = jnp.pad(b2.reshape(1, E).astype(jnp.float32),
                   ((0, 0), (0, E_pad - E)))

    grid = (M_pad // TM, H_pad // TH)

    kernel = functools.partial(_ffn_kernel,
                               e_real=float(E),
                               e_col_pad=float(E_pad - E))

    cost = pl.CostEstimate(
        flops=4 * M_pad * E_pad * H_pad,                 # two matmuls
        transcendentals=M_pad * (H_pad + E_pad),         # two GELUs (erf)
        bytes_accessed=(4 * 2 * M_pad * E_pad            # x in + out (f32)
                        + 2 * 2 * E_pad * H_pad          # w1 + w2 (bf16)
                        + 4 * (3 * E_pad + H_pad)))      # gamma/beta/b1/b2

    out2d = pl.pallas_call(
        kernel,
        out_shape=jax.ShapeDtypeStruct((M_pad, E_pad), x.dtype),
        grid_spec=pltpu.PrefetchScalarGridSpec(
            num_scalar_prefetch=0,
            grid=grid,
            in_specs=[
                pl.BlockSpec((TM, E_pad), lambda i, k: (i, 0)),    # x
                pl.BlockSpec((1, E_pad), lambda i, k: (0, 0)),     # gamma
                pl.BlockSpec((1, E_pad), lambda i, k: (0, 0)),     # beta
                pl.BlockSpec((E_pad, TH), lambda i, k: (0, k)),    # w1
                pl.BlockSpec((1, TH), lambda i, k: (0, k)),        # b1
                pl.BlockSpec((TH, E_pad), lambda i, k: (k, 0)),    # w2
                pl.BlockSpec((1, E_pad), lambda i, k: (0, 0)),     # b2
            ],
            out_specs=pl.BlockSpec((TM, E_pad), lambda i, k: (i, 0)),
            scratch_shapes=[
                pltpu.VMEM((TM, E_pad), jnp.bfloat16),   # cached LayerNorm(x)
                pltpu.VMEM((TM, E_pad), jnp.float32),    # f32 accumulator
            ],
        ),
        compiler_params=pltpu.CompilerParams(
            dimension_semantics=("parallel", "arbitrary"),
            vmem_limit_bytes=48 * 1024 * 1024),
        cost_estimate=cost,
    )(x2d, gamma_p, beta_p, w1_p, b1_p, w2_p, b2_p)

    return out2d[:M, :E].reshape(B, S, E)


def init_params(key, emb_size, expansion=4):
    """Deterministic parameter init mimicking nn.Linear / nn.LayerNorm defaults."""
    hidden = emb_size * expansion
    k1, k2, k3, k4 = jax.random.split(key, 4)

    gamma = jnp.ones((1, emb_size), jnp.float32)
    beta = jnp.zeros((1, emb_size), jnp.float32)

    bound1 = 1.0 / math.sqrt(emb_size)
    w1 = jax.random.uniform(k1, (emb_size, hidden), jnp.float32,
                            -bound1, bound1)          # stored (in, out)
    b1 = jax.random.uniform(k2, (1, hidden), jnp.float32, -bound1, bound1)

    bound2 = 1.0 / math.sqrt(hidden)
    w2 = jax.random.uniform(k3, (hidden, emb_size), jnp.float32,
                            -bound2, bound2)          # stored (in, out)
    b2 = jax.random.uniform(k4, (1, emb_size), jnp.float32, -bound2, bound2)

    return gamma, beta, w1, b1, w2, b2


def _reference(x, gamma, beta, w1, b1, w2, b2):
    eps = 1e-5
    mean = jnp.mean(x, axis=-1, keepdims=True)
    var = jnp.mean((x - mean) ** 2, axis=-1, keepdims=True)
    xn = (x - mean) / jnp.sqrt(var + eps) * gamma[0] + beta[0]
    h = jax.nn.gelu(xn @ w1 + b1[0], approximate=False)
    o = jax.nn.gelu(h @ w2 + b2[0], approximate=False)
    return o + x


if __name__ == "__main__":
    key = jax.random.PRNGKey(0)
    k_x, k_p = jax.random.split(key)

    B, S, E = 2, 8, 32          # batch, seq, emb_size  (expansion=4 -> hidden=128)
    x = jax.random.normal(k_x, (B, S, E), jnp.float32)

    gamma, beta, w1, b1, w2, b2 = init_params(k_p, E, expansion=4)

    out = feed_forward_block(x, gamma, beta, w1, b1, w2, b2)
    out = jax.block_until_ready(out)

    ref = _reference(x, gamma, beta, w1, b1, w2, b2)
    assert out.shape == (B, S, E)
    # bf16 MXU operands (f32 accumulation) vs the all-f32 reference -> relaxed tol.
    assert jnp.allclose(out, ref, atol=5e-2, rtol=5e-2), "mismatch vs reference"

    print("KERNEL_OK")
</pallas_src>

<mosaic_0001>
module attributes {stable_mosaic.version = 11 : i64} {
  func.func @_ffn_kernel(%arg0: i32, %arg1: i32, %arg2: memref<16x128xf32, #tpu.memory_space<vmem>>, %arg3: memref<1x128xf32, #tpu.memory_space<vmem>>, %arg4: memref<1x128xf32, #tpu.memory_space<vmem>>, %arg5: memref<128x128xbf16, #tpu.memory_space<vmem>>, %arg6: memref<1x128xf32, #tpu.memory_space<vmem>>, %arg7: memref<128x128xbf16, #tpu.memory_space<vmem>>, %arg8: memref<1x128xf32, #tpu.memory_space<vmem>>, %arg9: memref<16x128xf32, #tpu.memory_space<vmem>>, %arg10: memref<16x128xbf16, #tpu.memory_space<vmem>>, %arg11: memref<16x128xf32, #tpu.memory_space<vmem>>) attributes {dimension_semantics = [#tpu.dimension_semantics<parallel>, #tpu.dimension_semantics<arbitrary>], iteration_bounds = array<i64: 1, 1>, scalar_prefetch = 0 : i64, scratch_operands = 2 : i64, tpu.core_type = #tpu.core_type<tc>, window_params = [{transform_indices = @transform_0, window_bounds = array<i64: 16, 128>}, {pipeline_mode = #tpu.pipeline_mode<synchronous>, transform_indices = @transform_1, window_bounds = array<i64: 1, 128>}, {pipeline_mode = #tpu.pipeline_mode<synchronous>, transform_indices = @transform_2, window_bounds = array<i64: 1, 128>}, {transform_indices = @transform_3, window_bounds = array<i64: 128, 128>}, {transform_indices = @transform_4, window_bounds = array<i64: 1, 128>}, {transform_indices = @transform_5, window_bounds = array<i64: 128, 128>}, {pipeline_mode = #tpu.pipeline_mode<synchronous>, transform_indices = @transform_6, window_bounds = array<i64: 1, 128>}, {transform_indices = @transform_7, window_bounds = array<i64: 16, 128>}]} {
    %c0_i32 = arith.constant 0 : i32
    %0 = arith.cmpi eq, %arg1, %c0_i32 : i32
    %1 = arith.extui %0 : i1 to i32
    %c0_i32_0 = arith.constant 0 : i32
    %2 = arith.cmpi ne, %1, %c0_i32_0 : i32
    scf.if %2 {
      %c0_18 = arith.constant 0 : index
      %c0_19 = arith.constant 0 : index
      %26 = vector.load %arg2[%c0_18, %c0_19] : memref<16x128xf32, #tpu.memory_space<vmem>>, vector<16x128xf32>
      %cst_20 = arith.constant dense<0.000000e+00> : vector<16xf32>
      %27 = vector.multi_reduction <add>, %26, %cst_20 [1] : vector<16x128xf32> to vector<16xf32>
      %28 = vector.shape_cast %27 : vector<16xf32> to vector<16x1xf32>
      %cst_21 = arith.constant 3.125000e-02 : f32
      %29 = vector.broadcast %cst_21 : f32 to vector<16x1xf32>
      %30 = arith.mulf %28, %29 : vector<16x1xf32>
      %31 = vector.broadcast %30 : vector<16x1xf32> to vector<16x128xf32>
      %32 = arith.subf %26, %31 : vector<16x128xf32>
      %33 = arith.mulf %32, %32 : vector<16x128xf32>
      %cst_22 = arith.constant dense<0.000000e+00> : vector<16xf32>
      %34 = vector.multi_reduction <add>, %33, %cst_22 [1] : vector<16x128xf32> to vector<16xf32>
      %35 = vector.shape_cast %34 : vector<16xf32> to vector<16x1xf32>
      %cst_23 = arith.constant 9.600000e+01 : f32
      %36 = vector.broadcast %cst_23 : f32 to vector<16x1xf32>
      %37 = arith.mulf %36, %30 : vector<16x1xf32>
      %38 = arith.mulf %37, %30 : vector<16x1xf32>
      %39 = arith.subf %35, %38 : vector<16x1xf32>
      %cst_24 = arith.constant 3.125000e-02 : f32
      %40 = vector.broadcast %cst_24 : f32 to vector<16x1xf32>
      %41 = arith.mulf %39, %40 : vector<16x1xf32>
      %cst_25 = arith.constant 9.99999974E-6 : f32
      %42 = vector.broadcast %cst_25 : f32 to vector<16x1xf32>
      %43 = arith.addf %41, %42 : vector<16x1xf32>
      %44 = math.rsqrt %43 : vector<16x1xf32>
      %45 = vector.broadcast %44 : vector<16x1xf32> to vector<16x128xf32>
      %46 = arith.mulf %32, %45 : vector<16x128xf32>
      %c0_26 = arith.constant 0 : index
      %c0_27 = arith.constant 0 : index
      %47 = vector.load %arg3[%c0_26, %c0_27] : memref<1x128xf32, #tpu.memory_space<vmem>>, vector<1x128xf32>
      %48 = vector.broadcast %47 : vector<1x128xf32> to vector<16x128xf32>
      %49 = arith.mulf %46, %48 : vector<16x128xf32>
      %c0_28 = arith.constant 0 : index
      %c0_29 = arith.constant 0 : index
      %50 = vector.load %arg4[%c0_28, %c0_29] : memref<1x128xf32, #tpu.memory_space<vmem>>, vector<1x128xf32>
      %51 = vector.broadcast %50 : vector<1x128xf32> to vector<16x128xf32>
      %52 = arith.addf %49, %51 : vector<16x128xf32>
      %53 = arith.truncf %52 : vector<16x128xf32> to vector<16x128xbf16>
      %c0_30 = arith.constant 0 : index
      %c0_31 = arith.constant 0 : index
      %54 = vector.load %arg10[%c0_30, %c0_31] : memref<16x128xbf16, #tpu.memory_space<vmem>>, vector<16x128xbf16>
      tpu.vector_store %arg10[%c0_30, %c0_31], %53 {strides = array<i32>} : memref<16x128xbf16, #tpu.memory_space<vmem>>, vector<16x128xbf16>,
      %cst_32 = arith.constant 0.000000e+00 : f32
      %55 = vector.broadcast %cst_32 : f32 to vector<16x128xf32>
      %c0_33 = arith.constant 0 : index
      %c0_34 = arith.constant 0 : index
      %56 = vector.load %arg11[%c0_33, %c0_34] : memref<16x128xf32, #tpu.memory_space<vmem>>, vector<16x128xf32>
      tpu.vector_store %arg11[%c0_33, %c0_34], %55 {strides = array<i32>} : memref<16x128xf32, #tpu.memory_space<vmem>>, vector<16x128xf32>,
    } else {
    }
    %c0 = arith.constant 0 : index
    %c0_1 = arith.constant 0 : index
    %3 = vector.load %arg10[%c0, %c0_1] : memref<16x128xbf16, #tpu.memory_space<vmem>>, vector<16x128xbf16>
    %c0_2 = arith.constant 0 : index
    %c0_3 = arith.constant 0 : index
    %4 = vector.load %arg5[%c0_2, %c0_3] : memref<128x128xbf16, #tpu.memory_space<vmem>>, vector<128x128xbf16>
    %cst = arith.constant dense<0.000000e+00> : vector<16x128xf32>
    %5 = tpu.matmul %3, %4, %cst {dimension_numbers = #tpu.dot_dimension_numbers<[1], [0], [0], [1], [0, 0, 1, 1], [], []>} : vector<16x128xbf16>, vector<128x128xbf16>, vector<16x128xf32> -> vector<16x128xf32>
    %c0_4 = arith.constant 0 : index
    %c0_5 = arith.constant 0 : index
    %6 = vector.load %arg6[%c0_4, %c0_5] : memref<1x128xf32, #tpu.memory_space<vmem>>, vector<1x128xf32>
    %7 = vector.broadcast %6 : vector<1x128xf32> to vector<16x128xf32>
    %8 = arith.addf %5, %7 : vector<16x128xf32>
    %cst_6 = arith.constant 5.000000e-01 : f32
    %9 = vector.broadcast %cst_6 : f32 to vector<16x128xf32>
    %10 = arith.mulf %9, %8 : vector<16x128xf32>
    %cst_7 = arith.constant 0.707106769 : f32
    %11 = vector.broadcast %cst_7 : f32 to vector<16x128xf32>
    %12 = arith.mulf %8, %11 : vector<16x128xf32>
    %13 = math.erf %12 : vector<16x128xf32>
    %cst_8 = arith.constant 1.000000e+00 : f32
    %14 = vector.broadcast %cst_8 : f32 to vector<16x128xf32>
    %15 = arith.addf %14, %13 : vector<16x128xf32>
    %16 = arith.mulf %10, %15 : vector<16x128xf32>
    %c0_9 = arith.constant 0 : index
    %c0_10 = arith.constant 0 : index
    %17 = vector.load %arg11[%c0_9, %c0_10] : memref<16x128xf32, #tpu.memory_space<vmem>>, vector<16x128xf32>
    %18 = arith.truncf %16 : vector<16x128xf32> to vector<16x128xbf16>
    %c0_11 = arith.constant 0 : index
    %c0_12 = arith.constant 0 : index
    %19 = vector.load %arg7[%c0_11, %c0_12] : memref<128x128xbf16, #tpu.memory_space<vmem>>, vector<128x128xbf16>
    %cst_13 = arith.constant dense<0.000000e+00> : vector<16x128xf32>
    %20 = tpu.matmul %18, %19, %cst_13 {dimension_numbers = #tpu.dot_dimension_numbers<[1], [0], [0], [1], [0, 0, 1, 1], [], []>} : vector<16x128xbf16>, vector<128x128xbf16>, vector<16x128xf32> -> vector<16x128xf32>
    %21 = arith.addf %17, %20 : vector<16x128xf32>
    %c0_14 = arith.constant 0 : index
    %c0_15 = arith.constant 0 : index
    %22 = vector.load %arg11[%c0_14, %c0_15] : memref<16x128xf32, #tpu.memory_space<vmem>>, vector<16x128xf32>
    tpu.vector_store %arg11[%c0_14, %c0_15], %21 {strides = array<i32>} : memref<16x128xf32, #tpu.memory_space<vmem>>, vector<16x128xf32>,
    %c0_i32_16 = arith.constant 0 : i32
    %23 = arith.cmpi eq, %arg1, %c0_i32_16 : i32
    %24 = arith.extui %23 : i1 to i32
    %c0_i32_17 = arith.constant 0 : i32
    %25 = arith.cmpi ne, %24, %c0_i32_17 : i32
    scf.if %25 {
      %c0_18 = arith.constant 0 : index
      %c0_19 = arith.constant 0 : index
      %26 = vector.load %arg11[%c0_18, %c0_19] : memref<16x128xf32, #tpu.memory_space<vmem>>, vector<16x128xf32>
      %c0_20 = arith.constant 0 : index
      %c0_21 = arith.constant 0 : index
      %27 = vector.load %arg8[%c0_20, %c0_21] : memref<1x128xf32, #tpu.memory_space<vmem>>, vector<1x128xf32>
      %28 = vector.broadcast %27 : vector<1x128xf32> to vector<16x128xf32>
      %29 = arith.addf %26, %28 : vector<16x128xf32>
      %cst_22 = arith.constant 5.000000e-01 : f32
      %30 = vector.broadcast %cst_22 : f32 to vector<16x128xf32>
      %31 = arith.mulf %30, %29 : vector<16x128xf32>
      %cst_23 = arith.constant 0.707106769 : f32
      %32 = vector.broadcast %cst_23 : f32 to vector<16x128xf32>
      %33 = arith.mulf %29, %32 : vector<16x128xf32>
      %34 = math.erf %33 : vector<16x128xf32>
      %cst_24 = arith.constant 1.000000e+00 : f32
      %35 = vector.broadcast %cst_24 : f32 to vector<16x128xf32>
      %36 = arith.addf %35, %34 : vector<16x128xf32>
      %37 = arith.mulf %31, %36 : vector<16x128xf32>
      %c0_25 = arith.constant 0 : index
      %c0_26 = arith.constant 0 : index
      %38 = vector.load %arg2[%c0_25, %c0_26] : memref<16x128xf32, #tpu.memory_space<vmem>>, vector<16x128xf32>
      %39 = arith.addf %37, %38 : vector<16x128xf32>
      %c0_27 = arith.constant 0 : index
      %c0_28 = arith.constant 0 : index
      %40 = vector.load %arg9[%c0_27, %c0_28] : memref<16x128xf32, #tpu.memory_space<vmem>>, vector<16x128xf32>
      tpu.vector_store %arg9[%c0_27, %c0_28], %39 {strides = array<i32>} : memref<16x128xf32, #tpu.memory_space<vmem>>, vector<16x128xf32>,
    } else {
    }
    return
  }
  func.func @transform_0(%arg0: i32, %arg1: i32) -> (i32, i32) {
    %c0_i32 = arith.constant 0 : i32
    %c0_i32_0 = arith.constant 0 : i32
    return %arg0, %c0_i32 : i32, i32
  }
  func.func @transform_1(%arg0: i32, %arg1: i32) -> (i32, i32) {
    %c0_i32 = arith.constant 0 : i32
    %c0_i32_0 = arith.constant 0 : i32
    %c0_i32_1 = arith.constant 0 : i32
    return %c0_i32, %c0_i32_0 : i32, i32
  }
  func.func @transform_2(%arg0: i32, %arg1: i32) -> (i32, i32) {
    %c0_i32 = arith.constant 0 : i32
    %c0_i32_0 = arith.constant 0 : i32
    %c0_i32_1 = arith.constant 0 : i32
    return %c0_i32, %c0_i32_0 : i32, i32
  }
  func.func @transform_3(%arg0: i32, %arg1: i32) -> (i32, i32) {
    %c0_i32 = arith.constant 0 : i32
    %c0_i32_0 = arith.constant 0 : i32
    return %c0_i32, %arg1 : i32, i32
  }
  func.func @transform_4(%arg0: i32, %arg1: i32) -> (i32, i32) {
    %c0_i32 = arith.constant 0 : i32
    %c0_i32_0 = arith.constant 0 : i32
    return %c0_i32, %arg1 : i32, i32
  }
  func.func @transform_5(%arg0: i32, %arg1: i32) -> (i32, i32) {
    %c0_i32 = arith.constant 0 : i32
    %c0_i32_0 = arith.constant 0 : i32
    return %arg1, %c0_i32 : i32, i32
  }
  func.func @transform_6(%arg0: i32, %arg1: i32) -> (i32, i32) {
    %c0_i32 = arith.constant 0 : i32
    %c0_i32_0 = arith.constant 0 : i32
    %c0_i32_1 = arith.constant 0 : i32
    return %c0_i32, %c0_i32_0 : i32, i32
  }
  func.func @transform_7(%arg0: i32, %arg1: i32) -> (i32, i32) {
    %c0_i32 = arith.constant 0 : i32
    %c0_i32_0 = arith.constant 0 : i32
    return %arg0, %c0_i32 : i32, i32
  }
}

</mosaic_0001>

<llo_original>
// kernel: tpu_custom_call.1
$region0: #{tpu_custom_call.1}
  #allocation0 [shape = 'u32[]', space=smem, size = 0x4, offset = 0x4, fixed_abs, tag = 'smem constant byte address 0x4 - core index']
  #allocation1 [shape = 'u32[144,128]{1,0:T(1,128)}', space=vmem, size = 0x12000, scoped, tag = 'internal scratch']
  #allocation2 [shape = 'bf16[16,128]{1,0:T(16,128)(2,1)}', space=vmem, size = 0x1000, scoped, tag = 'scratch operand']
  #allocation3 [shape = 'f32[16,128]{1,0:T(8,128)}', space=vmem, size = 0x2000, scoped, tag = 'scratch operand']
  %s0 = inlined_call_operand.hbm [shape: f32[16,128], index: 0, kind: input, shape index: {}]
  %s1 = inlined_call_operand.vmem [shape: f32[1,128], index: 1, kind: input, shape index: {}]
  %s2 = inlined_call_operand.vmem [shape: f32[1,128], index: 2, kind: input, shape index: {}]
  %s3 = inlined_call_operand.hbm [shape: bf16[128,128], index: 3, kind: input, shape index: {}]
  %s4 = inlined_call_operand.vmem [shape: f32[1,128], index: 4, kind: input, shape index: {}]
  %s5 = inlined_call_operand.hbm [shape: bf16[128,128], index: 5, kind: input, shape index: {}]
  %s6 = inlined_call_operand.vmem [shape: f32[1,128], index: 6, kind: input, shape index: {}]
  %s7 = inlined_call_operand.hbm [shape: f32[16,128], index: 7, kind: output, shape index: {}]
  %s8 = sld [smem:[#allocation0]]
  $region58: #{tpu_custom_call.1} parent=0
    _
  %s10 = ssub.s32 1, %s8
  %s11 = scalar_select 0, %s10, %s8
  $region1: #{tpu_custom_call.1} parent=0
    #allocation4 [shape = 'u8[8192]{0}', space=vmem, size = 0x2000, scoped, tag = 'input window, operand 0, single buffered']
    #allocation5 [shape = 's32[1]{0}', space=sflag, size = 0x4, scoped, tag = 'scoped memory for tpu_custom_call.1']
    #allocation6 [shape = 's32[1]{0}', space=sflag, size = 0x4, scoped, tag = 'scoped memory for tpu_custom_call.1']
    #allocation7 [shape = 'u8[32768]{0}', space=vmem, size = 0x8000, scoped, tag = 'input window, operand 3, single buffered']
    #allocation8 [shape = 's32[1]{0}', space=sflag, size = 0x4, scoped, tag = 'scoped memory for tpu_custom_call.1']
    #allocation9 [shape = 'u8[32768]{0}', space=vmem, size = 0x8000, scoped, tag = 'input window, operand 5, single buffered']
    #allocation10 [shape = 'u8[8192]{0}', space=vmem, size = 0x2000, scoped, tag = 'output window, operand 0, single buffered']
    %12 = vsyncpa [#allocation5], 0
    %13 = vsyncpa [#allocation8], 0
    %14 = vsyncpa [#allocation6], 0
    // Predicated region
    $region2: #{tpu_custom_call.1} parent=1 // pred_check
      _
    $region3: #{tpu_custom_call.1} parent=1 // pred_check_branch
      %16 = sbr.rel (0) target = $region5
    $region4: #{tpu_custom_call.1} parent=1 // pred_region
      %s18 = ssub.s32 256, 256
      %19 = vsyncadd [#allocation5], %s18
      %s20 = sshll.u32 [#allocation4], 4
      %s21 = int_to_ptr.vmem [resolvable:$true] %s20
      %26 = dma.hbm_to_vmem [thread:$0]  %s0, 256, %s21, [#allocation5], 128, 128, 8
    $region5: #{tpu_custom_call.1} parent=1 // pred_fallthru
      _
    // Predicated region
    $region6: #{tpu_custom_call.1} parent=1 // pred_check
      _
    $region7: #{tpu_custom_call.1} parent=1 // pred_check_branch
      %28 = sbr.rel (0) target = $region9
    $region8: #{tpu_custom_call.1} parent=1 // pred_region
      _
    $region9: #{tpu_custom_call.1} parent=1 // pred_fallthru
      _
    // Predicated region
    $region10: #{tpu_custom_call.1} parent=1 // pred_check
      _
    $region11: #{tpu_custom_call.1} parent=1 // pred_check_branch
      %30 = sbr.rel (0) target = $region13
    $region12: #{tpu_custom_call.1} parent=1 // pred_region
      _
    $region13: #{tpu_custom_call.1} parent=1 // pred_fallthru
      _
    // Predicated region
    $region14: #{tpu_custom_call.1} parent=1 // pred_check
      _
    $region15: #{tpu_custom_call.1} parent=1 // pred_check_branch
      %32 = sbr.rel (0) target = $region17
    $region16: #{tpu_custom_call.1} parent=1 // pred_region
      %s34 = ssub.s32 1024, 1024
      %35 = vsyncadd [#allocation8], %s34
      %s36 = sshll.u32 [#allocation7], 4
      %s37 = int_to_ptr.vmem [resolvable:$true] %s36
      %42 = dma.hbm_to_vmem [thread:$0]  %s3, 1024, %s37, [#allocation8], 64, 64, 4
    $region17: #{tpu_custom_call.1} parent=1 // pred_fallthru
      _
    // Predicated region
    $region18: #{tpu_custom_call.1} parent=1 // pred_check
      _
    $region19: #{tpu_custom_call.1} parent=1 // pred_check_branch
      %44 = sbr.rel (0) target = $region21
    $region20: #{tpu_custom_call.1} parent=1 // pred_region
      _
    $region21: #{tpu_custom_call.1} parent=1 // pred_fallthru
      _
    // Predicated region
    $region22: #{tpu_custom_call.1} parent=1 // pred_check
      _
    $region23: #{tpu_custom_call.1} parent=1 // pred_check_branch
      %46 = sbr.rel (0) target = $region25
    $region24: #{tpu_custom_call.1} parent=1 // pred_region
      %s48 = ssub.s32 1024, 1024
      %49 = vsyncadd [#allocation8], %s48
      %s50 = sshll.u32 [#allocation9], 4
      %s51 = int_to_ptr.vmem [resolvable:$true] %s50
      %56 = dma.hbm_to_vmem [thread:$0]  %s5, 1024, %s51, [#allocation8], 64, 64, 4
    $region25: #{tpu_custom_call.1} parent=1 // pred_fallthru
      _
    // Predicated region
    $region26: #{tpu_custom_call.1} parent=1 // pred_check
      _
    $region27: #{tpu_custom_call.1} parent=1 // pred_check_branch
      %58 = sbr.rel (0) target = $region29
    $region28: #{tpu_custom_call.1} parent=1 // pred_region
      _
    $region29: #{tpu_custom_call.1} parent=1 // pred_fallthru
      _
    // Predicated region
    $region30: #{tpu_custom_call.1} parent=1 // pred_check
      _
    $region31: #{tpu_custom_call.1} parent=1 // pred_check_branch
      %60 = sbr.rel (0) target = $region33
    $region32: #{tpu_custom_call.1} parent=1 // pred_region
      %61 = dma.done [#allocation5], 256
    $region33: #{tpu_custom_call.1} parent=1 // pred_fallthru
      _
    // Predicated region
    $region34: #{tpu_custom_call.1} parent=1 // pred_check
      _
    $region35: #{tpu_custom_call.1} parent=1 // pred_check_branch
      %63 = sbr.rel (0) target = $region37
    $region36: #{tpu_custom_call.1} parent=1 // pred_region
      %64 = dma.done [#allocation8], 1024
    $region37: #{tpu_custom_call.1} parent=1 // pred_fallthru
      _
    // Predicated region
    $region38: #{tpu_custom_call.1} parent=1 // pred_check
      _
    $region39: #{tpu_custom_call.1} parent=1 // pred_check_branch
      %66 = sbr.rel (0) target = $region41
    $region40: #{tpu_custom_call.1} parent=1 // pred_region
      %67 = dma.done [#allocation8], 1024
    $region41: #{tpu_custom_call.1} parent=1 // pred_fallthru
      _
    %p69 = scmp.eq.s32.totalorder 0, 0
    // Predicated region
    $region42: #{tpu_custom_call.1} parent=1 // pred_check
      %p70 = pneg %p69
    $region43: #{tpu_custom_call.1} parent=1 // pred_check_branch
      %72 = sbr.rel (%p70) target = $region45
    $region44: #{tpu_custom_call.1} parent=1 // pred_region
      %v73 = vld [vmem:[#allocation4] sm:$0xff]
      %v74 = vld [vmem:[#allocation4 + $0x8] sm:$0xff]
      %75 = vadd.xlane.f32.xlu0 %v73
      %v76 = vpop.xlane.xlu0 %75
      %77 = vadd.xlane.f32.xlu0 %v74
      %v78 = vpop.xlane.xlu0 %77
      %v79 = vmul.f32 %v76, 0.03125
      %v80 = vmul.f32 %v78, 0.03125
      %v81 = vsub.f32 %v73, %v79
      %v82 = vsub.f32 %v74, %v80
      %v83 = vmul.f32 %v81, %v81
      %v84 = vmul.f32 %v82, %v82
      %85 = vadd.xlane.f32.xlu0 %v83
      %v86 = vpop.xlane.xlu0 %85
      %87 = vadd.xlane.f32.xlu0 %v84
      %v88 = vpop.xlane.xlu0 %87
      %v89 = vmul.f32 %v79, 96.0
      %v90 = vmul.f32 %v80, 96.0
      %v91 = vmul.f32 %v89, %v79
      %v92 = vmul.f32 %v90, %v80
      %v93 = vsub.f32 %v86, %v91
      %v94 = vsub.f32 %v88, %v92
      %v95 = vmul.f32 %v93, 0.03125
      %v96 = vmul.f32 %v94, 0.03125
      %v97 = vadd.f32 %v95, 1e-05
      %v98 = vadd.f32 %v96, 1e-05
      %v99 = vrsqrt.pop %v97
      %v100 = vrsqrt.pop %v98
      %v101 = vmul.f32 %v81, %v99
      %v102 = vmul.f32 %v82, %v100
      %v103 = vld [vmem:[%s1] sm:$0x1]
      %v105 = vlaneseq
      %v106 = vshrl.u32 %v105, 7
      %v107 = vsub.s32 0, %v106
      %v108 = vrot.slane %v103, %v107
      %v110 = vmul.f32 %v101, %v108
      %v111 = vmul.f32 %v102, %v108
      %v112 = vld [vmem:[%s2] sm:$0x1]
      %v114 = vlaneseq
      %v115 = vshrl.u32 %v114, 7
      %v116 = vsub.s32 0, %v115
      %v117 = vrot.slane %v112, %v116
      %v119 = vadd.f32 %v110, %v117
      %v120 = vadd.f32 %v111, %v117
      %v121 = vpack.c.bf16 %v120, %v119
      %122 = vst [vmem:[#allocation2] sm:$0xff] %v121
      %123 = vst [vmem:[#allocation3] sm:$0xff] 0.0
      %124 = vst [vmem:[#allocation3 + $0x8] sm:$0xff] 0.0
    $region45: #{tpu_custom_call.1} parent=1 // pred_fallthru
      _
    %v125 = vld [vmem:[#allocation2] sm:$0xff]
    %v126 = vld [vmem:[#allocation7] sm:$0xf]
    %v127 = vld [vmem:[#allocation7 + $0x4] sm:$0xf]
    %v128 = vld [vmem:[#allocation7 + $0x8] sm:$0xf]
    %v129 = vld [vmem:[#allocation7 + $0xc] sm:$0xf]
    %v130 = vld [vmem:[#allocation7 + $0x10] sm:$0xf]
    %v131 = vld [vmem:[#allocation7 + $0x14] sm:$0xf]
    %v132 = vld [vmem:[#allocation7 + $0x18] sm:$0xf]
    %v133 = vld [vmem:[#allocation7 + $0x1c] sm:$0xf]
    %v134 = vld [vmem:[#allocation7 + $0x20] sm:$0xf]
    %v135 = vld [vmem:[#allocation7 + $0x24] sm:$0xf]
    %v136 = vld [vmem:[#allocation7 + $0x28] sm:$0xf]
    %v137 = vld [vmem:[#allocation7 + $0x2c] sm:$0xf]
    %v138 = vld [vmem:[#allocation7 + $0x30] sm:$0xf]
    %v139 = vld [vmem:[#allocation7 + $0x34] sm:$0xf]
    %v140 = vld [vmem:[#allocation7 + $0x38] sm:$0xf]
    %v141 = vld [vmem:[#allocation7 + $0x3c] sm:$0xf]
    %v142 = vld [vmem:[%s4] sm:$0x1]
    %v144 = vlaneseq
    %v145 = vshrl.u32 %v144, 7
    %v146 = vsub.s32 0, %v145
    %v147 = vrot.slane %v142, %v146
    %v165 = vunpack.c.l.b16 %v126
    %v166 = vunpack.c.l.b16 %v127
    %v167 = vunpack.c.l.b16 %v128
    %v168 = vunpack.c.l.b16 %v129
    %v169 = vunpack.c.l.b16 %v130
    %v170 = vunpack.c.l.b16 %v131
    %v171 = vunpack.c.l.b16 %v132
    %v172 = vunpack.c.l.b16 %v133
    %v173 = vunpack.c.l.b16 %v134
    %v174 = vunpack.c.l.b16 %v135
    %v175 = vunpack.c.l.b16 %v136
    %v176 = vunpack.c.l.b16 %v137
    %v177 = vunpack.c.l.b16 %v138
    %v178 = vunpack.c.l.b16 %v139
    %v179 = vunpack.c.l.b16 %v140
    %v180 = vunpack.c.l.b16 %v141
    %v181 = vpack.c.b16 %v166, %v165
    %v182 = vpack.c.b16 %v168, %v167
    %v183 = vpack.c.b16 %v170, %v169
    %v184 = vpack.c.b16 %v172, %v171
    %v185 = vpack.c.b16 %v174, %v173
    %v186 = vpack.c.b16 %v176, %v175
    %v187 = vpack.c.b16 %v178, %v177
    %v188 = vpack.c.b16 %v180, %v179
    %197 = vmatprep.subr.bf16.mxu0 0
    %198 = vmatpush1.bf16.msra.mxu0 %v181
    %199 = vmatprep.subr.bf16.mxu0 0
    %200 = vmatpush1.bf16.msra.mxu0 %v182
    %201 = vmatprep.subr.bf16.mxu0 0
    %202 = vmatpush1.bf16.msra.mxu0 %v183
    %203 = vmatprep.subr.bf16.mxu0 0
    %204 = vmatpush1.bf16.msra.mxu0 %v184
    %205 = vmatprep.subr.bf16.mxu0 0
    %206 = vmatpush1.bf16.msra.mxu0 %v185
    %207 = vmatprep.subr.bf16.mxu0 0
    %208 = vmatpush1.bf16.msra.mxu0 %v186
    %209 = vmatprep.subr.bf16.mxu0 0
    %210 = vmatpush1.bf16.msra.mxu0 %v187
    %211 = vmatprep.subr.bf16.mxu0 0
    %212 = vmatpush1.bf16.msra.mxu0 %v188
    %213 = vmatprep.subr.bf16.mxu0 0
    %214 = vmatpush1.bf16.msra.mxu0 0
    %215 = vmatprep.subr.bf16.mxu0 0
    %216 = vmatpush1.bf16.msra.mxu0 0
    %217 = vmatprep.subr.bf16.mxu0 0
    %218 = vmatpush1.bf16.msra.mxu0 0
    %219 = vmatprep.subr.bf16.mxu0 0
    %220 = vmatpush1.bf16.msra.mxu0 0
    %221 = vmatprep.subr.bf16.mxu0 0
    %222 = vmatpush1.bf16.msra.mxu0 0
    %223 = vmatprep.subr.bf16.mxu0 0
    %224 = vmatpush1.bf16.msra.mxu0 0
    %225 = vmatprep.subr.bf16.mxu0 0
    %226 = vmatpush1.bf16.msra.mxu0 0
    %227 = vmatprep.subr.bf16.mxu0 0
    %228 = vmatpush1.bf16.msra.mxu0 0
    %229 = vmatprep.mubr.bf16.mxu0 0
    %230 = vmatmul.mubr.bf16.gmra.mrb[0].mxu0 %v125
    %v231 = vpop.f32.mrb[0].mxu0
    %v232 = vadd.f32 %v147, %v231
    %v233 = vpop.f32.mrb[0].mxu0
    %v234 = vpop.f32.mrb[0].mxu0
    %v235 = vadd.f32 %v147, %v234
    %v236 = vpop.f32.mrb[0].mxu0
    %237 = vdwg.mxu0
    %v238 = vmul.f32 %v232, 0.5
    %v239 = vmul.f32 %v235, 0.5
    %v240 = vmul.f32 %v232, 0.70710677
    %v241 = vmul.f32 %v235, 0.70710677
    %v242 = verf.f32.pop %v240
    %v243 = verf.f32.pop %v241
    %v244 = vadd.f32 %v242, 1.0
    %v245 = vadd.f32 %v243, 1.0
    %v246 = vmul.f32 %v238, %v244
    %v247 = vmul.f32 %v239, %v245
    %v248 = vld [vmem:[#allocation3] sm:$0xff]
    %v249 = vld [vmem:[#allocation3 + $0x8] sm:$0xff]
    %v250 = vpack.c.bf16 %v247, %v246
    %v251 = vld [vmem:[#allocation9] sm:$0xf]
    %v252 = vld [vmem:[#allocation9 + $0x4] sm:$0xf]
    %v253 = vld [vmem:[#allocation9 + $0x8] sm:$0xf]
    %v254 = vld [vmem:[#allocation9 + $0xc] sm:$0xf]
    %v255 = vld [vmem:[#allocation9 + $0x10] sm:$0xf]
    %v256 = vld [vmem:[#allocation9 + $0x14] sm:$0xf]
    %v257 = vld [vmem:[#allocation9 + $0x18] sm:$0xf]
    %v258 = vld [vmem:[#allocation9 + $0x1c] sm:$0xf]
    %v259 = vld [vmem:[#allocation9 + $0x20] sm:$0xf]
    %v260 = vld [vmem:[#allocation9 + $0x24] sm:$0xf]
    %v261 = vld [vmem:[#allocation9 + $0x28] sm:$0xf]
    %v262 = vld [vmem:[#allocation9 + $0x2c] sm:$0xf]
    %v263 = vld [vmem:[#allocation9 + $0x30] sm:$0xf]
    %v264 = vld [vmem:[#allocation9 + $0x34] sm:$0xf]
    %v265 = vld [vmem:[#allocation9 + $0x38] sm:$0xf]
    %v266 = vld [vmem:[#allocation9 + $0x3c] sm:$0xf]
    %v283 = vunpack.c.l.b16 %v251
    %v284 = vunpack.c.l.b16 %v252
    %v285 = vunpack.c.l.b16 %v253
    %v286 = vunpack.c.l.b16 %v254
    %v287 = vunpack.c.l.b16 %v255
    %v288 = vunpack.c.l.b16 %v256
    %v289 = vunpack.c.l.b16 %v257
    %v290 = vunpack.c.l.b16 %v258
    %v291 = vunpack.c.l.b16 %v259
    %v292 = vunpack.c.l.b16 %v260
    %v293 = vunpack.c.l.b16 %v261
    %v294 = vunpack.c.l.b16 %v262
    %v295 = vunpack.c.l.b16 %v263
    %v296 = vunpack.c.l.b16 %v264
    %v297 = vunpack.c.l.b16 %v265
    %v298 = vunpack.c.l.b16 %v266
    %v299 = vpack.c.b16 %v284, %v283
    %v300 = vpack.c.b16 %v286, %v285
    %v301 = vpack.c.b16 %v288, %v287
    %v302 = vpack.c.b16 %v290, %v289
    %v303 = vpack.c.b16 %v292, %v291
    %v304 = vpack.c.b16 %v294, %v293
    %v305 = vpack.c.b16 %v296, %v295
    %v306 = vpack.c.b16 %v298, %v297
    %315 = vmatprep.subr.bf16.mxu0 0
    %316 = vmatpush1.bf16.msra.mxu0 %v299
    %317 = vmatprep.subr.bf16.mxu0 0
    %318 = vmatpush1.bf16.msra.mxu0 %v300
    %319 = vmatprep.subr.bf16.mxu0 0
    %320 = vmatpush1.bf16.msra.mxu0 %v301
    %321 = vmatprep.subr.bf16.mxu0 0
    %322 = vmatpush1.bf16.msra.mxu0 %v302
    %323 = vmatprep.subr.bf16.mxu0 0
    %324 = vmatpush1.bf16.msra.mxu0 %v303
    %325 = vmatprep.subr.bf16.mxu0 0
    %326 = vmatpush1.bf16.msra.mxu0 %v304
    %327 = vmatprep.subr.bf16.mxu0 0
    %328 = vmatpush1.bf16.msra.mxu0 %v305
    %329 = vmatprep.subr.bf16.mxu0 0
    %330 = vmatpush1.bf16.msra.mxu0 %v306
    %331 = vmatprep.subr.bf16.mxu0 0
    %332 = vmatpush1.bf16.msra.mxu0 0
    %333 = vmatprep.subr.bf16.mxu0 0
    %334 = vmatpush1.bf16.msra.mxu0 0
    %335 = vmatprep.subr.bf16.mxu0 0
    %336 = vmatpush1.bf16.msra.mxu0 0
    %337 = vmatprep.subr.bf16.mxu0 0
    %338 = vmatpush1.bf16.msra.mxu0 0
    %339 = vmatprep.subr.bf16.mxu0 0
    %340 = vmatpush1.bf16.msra.mxu0 0
    %341 = vmatprep.subr.bf16.mxu0 0
    %342 = vmatpush1.bf16.msra.mxu0 0
    %343 = vmatprep.subr.bf16.mxu0 0
    %344 = vmatpush1.bf16.msra.mxu0 0
    %345 = vmatprep.subr.bf16.mxu0 0
    %346 = vmatpush1.bf16.msra.mxu0 0
    %347 = vmatprep.mubr.bf16.mxu0 0
    %348 = vmatmul.mubr.bf16.gmra.mrb[0].mxu0 %v250
    %v349 = vpop.f32.mrb[0].mxu0
    %v350 = vadd.f32 0.0, %v349
    %v351 = vpop.f32.mrb[0].mxu0
    %v352 = vpop.f32.mrb[0].mxu0
    %v353 = vadd.f32 0.0, %v352
    %v354 = vpop.f32.mrb[0].mxu0
    %355 = vdwg.mxu0
    %v356 = vadd.f32 %v248, %v350
    %v357 = vadd.f32 %v249, %v353
    %358 = vst [vmem:[#allocation3] sm:$0xff] %v356
    %359 = vst [vmem:[#allocation3 + $0x8] sm:$0xff] %v357
    // Predicated region
    $region46: #{tpu_custom_call.1} parent=1 // pred_check
      %p360 = pneg %p69
    $region47: #{tpu_custom_call.1} parent=1 // pred_check_branch
      %362 = sbr.rel (%p360) target = $region49
    $region48: #{tpu_custom_call.1} parent=1 // pred_region
      %v363 = vld [vmem:[#allocation3] sm:$0xff]
      %v364 = vld [vmem:[#allocation3 + $0x8] sm:$0xff]
      %v365 = vld [vmem:[%s6] sm:$0x1]
      %v367 = vlaneseq
      %v368 = vshrl.u32 %v367, 7
      %v369 = vsub.s32 0, %v368
      %v370 = vrot.slane %v365, %v369
      %v372 = vadd.f32 %v363, %v370
      %v373 = vadd.f32 %v364, %v370
      %v374 = vmul.f32 %v372, 0.5
      %v375 = vmul.f32 %v373, 0.5
      %v376 = vmul.f32 %v372, 0.70710677
      %v377 = vmul.f32 %v373, 0.70710677
      %v378 = verf.f32.pop %v376
      %v379 = verf.f32.pop %v377
      %v380 = vadd.f32 %v378, 1.0
      %v381 = vadd.f32 %v379, 1.0
      %v382 = vmul.f32 %v374, %v380
      %v383 = vmul.f32 %v375, %v381
      %v384 = vld [vmem:[#allocation4] sm:$0xff]
      %v385 = vld [vmem:[#allocation4 + $0x8] sm:$0xff]
      %v386 = vadd.f32 %v382, %v384
      %v387 = vadd.f32 %v383, %v385
      %388 = vst [vmem:[#allocation10] sm:$0xff] %v386
      %389 = vst [vmem:[#allocation10 + $0x8] sm:$0xff] %v387
    $region49: #{tpu_custom_call.1} parent=1 // pred_fallthru
      _
    // Predicated region
    $region50: #{tpu_custom_call.1} parent=1 // pred_check
      _
    $region51: #{tpu_custom_call.1} parent=1 // pred_check_branch
      %391 = sbr.rel (0) target = $region53
    $region52: #{tpu_custom_call.1} parent=1 // pred_region
      %s393 = ssub.s32 256, 256
      %394 = vsyncadd [#allocation6], %s393
      %s395 = sshll.u32 [#allocation10], 4
      %s396 = int_to_ptr.vmem [resolvable:$true] %s395
      %401 = dma.vmem_to_hbm [thread:$0]  %s396, 256, %s7, [#allocation6], 128, 128, 8
    $region53: #{tpu_custom_call.1} parent=1 // pred_fallthru
      _
    // Predicated region
    $region54: #{tpu_custom_call.1} parent=1 // pred_check
      _
    $region55: #{tpu_custom_call.1} parent=1 // pred_check_branch
      %403 = sbr.rel (0) target = $region57
    $region56: #{tpu_custom_call.1} parent=1 // pred_region
      %404 = dma.done [#allocation6], 256
    $region57: #{tpu_custom_call.1} parent=1 // pred_fallthru
      _
    %405 = vsyncpa [#allocation5], 1
    %406 = vsyncpa [#allocation8], 1
    %407 = vsyncpa [#allocation6], 1

</llo_original>
